<compile_context>
chip_gen: v7x
topology: tpu7x:2x2x1
jax: 0.10.0
libtpu: 0.0.40
codegen_flags: <defaults>
</compile_context>

<pallas_src>
import jax
import jax.numpy as jnp
from jax.experimental import pallas as pl
from jax.experimental.pallas import tpu as pltpu

B_INIT = -0.2
LAYER_DIMS = [(60, 90), (90, 120), (120, 80), (80, 40), (40, 20)]
NUM_LAYERS = len(LAYER_DIMS)
PAD = 128            # every feature dim zero-padded to one 128-lane tile
BIAS_ROWS = 8        # bias slab rows padded to a sublane multiple
IN_DIM = LAYER_DIMS[0][0]
OUT_DIM = LAYER_DIMS[-1][1]
DEFAULT_TILE_B = 256  # trivially fits VMEM on v5e/v6e/v7x at this layer width


def _round_up(n, m):
    return ((n + m - 1) // m) * m


def mlp_kernel(x_ref, w_ref, b_ref, o_ref):
    """One batch tile through all 5 layers.

    x_ref: (TILE_B, 128) f32   -- input features zero-padded 60 -> 128
    w_ref: (5, 128, 128) bf16  -- layer i's (in, out) weight zero-padded into tile i
    b_ref: (8, 128)      f32   -- row i = layer-i bias zero-padded (rows 5..7 unused)
    o_ref: (TILE_B, 128) f32   -- columns 20..127 are exactly zero, sliced off outside

    Zero-padding is self-consistent: padded weight rows/cols and padded bias lanes
    contribute 0 to every dot, and tanh(0) = 0, so padded activation lanes stay 0.
    """
    h = x_ref[...]                       # f32 activations
    biases = b_ref[...]                  # (8, 128) f32
    for layer in range(NUM_LAYERS):
        # bf16 MXU inputs, f32 accumulation; bias-add / tanh in f32 (VPU/EUP).
        z = jnp.dot(h.astype(jnp.bfloat16), w_ref[layer],
                    preferred_element_type=jnp.float32)
        z = z + biases[layer][None, :]
        h = jnp.tanh(z) if layer < NUM_LAYERS - 1 else z
    o_ref[...] = h.astype(o_ref.dtype)


def init_params(key):
    """Match PyTorch _set_init: weight ~ N(0, 0.025), bias = -0.2.

    Weights are stored transposed as (in_features, out_features) so the kernel
    computes y = x @ W + b on the MXU.
    """
    params = []
    for (fan_in, fan_out) in LAYER_DIMS:
        key, sub = jax.random.split(key)
        w = 0.025 * jax.random.normal(sub, (fan_in, fan_out), dtype=jnp.float32)
        b = jnp.full((fan_out,), B_INIT, dtype=jnp.float32)
        params.append((w, b))
    return params


def pack_params(params, weight_dtype=jnp.bfloat16):
    """Pack the 10 small arrays into two aligned, lane-dense slabs."""
    w_slab = jnp.zeros((NUM_LAYERS, PAD, PAD), dtype=jnp.float32)
    b_slab = jnp.zeros((BIAS_ROWS, PAD), dtype=jnp.float32)
    for i, (w, b) in enumerate(params):
        fi, fo = w.shape
        w_slab = w_slab.at[i, :fi, :fo].set(w)
        b_slab = b_slab.at[i, :fo].set(b.reshape(-1))
    return w_slab.astype(weight_dtype), b_slab


def net_forward(x, w_slab, b_slab, tile_b=DEFAULT_TILE_B):
    batch = x.shape[0]
    tile_b = min(tile_b, _round_up(batch, 8))
    b_pad = _round_up(batch, tile_b)

    # Zero-pad batch to a tile multiple and features to 128 lanes.
    x_pad = jnp.zeros((b_pad, PAD), jnp.float32).at[:batch, :IN_DIM].set(x)

    flops = 2 * batch * sum(fi * fo for fi, fo in LAYER_DIMS)
    transcendentals = batch * sum(fo for _, fo in LAYER_DIMS[:-1])
    bytes_accessed = (x_pad.size * 4
                      + w_slab.size * w_slab.dtype.itemsize
                      + b_slab.size * 4
                      + b_pad * PAD * 4)

    out = pl.pallas_call(
        mlp_kernel,
        out_shape=jax.ShapeDtypeStruct((b_pad, PAD), jnp.float32),
        grid=(b_pad // tile_b,),
        in_specs=[
            pl.BlockSpec((tile_b, PAD), lambda i: (i, 0)),            # x: tiled over batch
            pl.BlockSpec((NUM_LAYERS, PAD, PAD), lambda i: (0, 0, 0)),  # weights: VMEM-resident
            pl.BlockSpec((BIAS_ROWS, PAD), lambda i: (0, 0)),           # biases: VMEM-resident
        ],
        out_specs=pl.BlockSpec((tile_b, PAD), lambda i: (i, 0)),
        compiler_params=pltpu.CompilerParams(
            dimension_semantics=("parallel",)),   # megacore sharding on v7x
        cost_estimate=pl.CostEstimate(
            flops=flops,
            transcendentals=transcendentals,
            bytes_accessed=bytes_accessed),
    )(x_pad, w_slab, b_slab)

    return out[:batch, :OUT_DIM]


def net_forward_ref(x, params):
    """Pure-JAX f32 reference (PyTorch-equivalent forward)."""
    h = x
    for i, (w, b) in enumerate(params):
        h = h @ w + b[None, :]
        if i < len(params) - 1:
            h = jnp.tanh(h)
    return h


if __name__ == "__main__":
    key = jax.random.PRNGKey(0)
    key, xkey1, xkey2 = jax.random.split(key, 3)

    params = init_params(key)
    w_slab, b_slab = pack_params(params)

    # Small single-tile case and a multi-tile case with batch padding.
    for batch, xkey in ((32, xkey1), (300, xkey2)):
        x = jax.random.normal(xkey, (batch, IN_DIM), dtype=jnp.float32)
        out = jax.block_until_ready(net_forward(x, w_slab, b_slab))
        ref = net_forward_ref(x, params)
        assert out.shape == (batch, OUT_DIM), out.shape
        # bf16 MXU inputs (f32 accumulation) -> tolerance loosened vs pure f32 reference.
        max_err = float(jnp.max(jnp.abs(out - ref)))
        assert jnp.allclose(out, ref, atol=2e-2, rtol=2e-2), max_err

    print("KERNEL_OK")
</pallas_src>

<mosaic_0001>
module attributes {stable_mosaic.version = 11 : i64} {
  func.func @mlp_kernel(%arg0: i32, %arg1: memref<32x128xf32, #tpu.memory_space<vmem>>, %arg2: memref<5x128x128xbf16, #tpu.memory_space<vmem>>, %arg3: memref<8x128xf32, #tpu.memory_space<vmem>>, %arg4: memref<32x128xf32, #tpu.memory_space<vmem>>) attributes {dimension_semantics = [#tpu.dimension_semantics<parallel>], iteration_bounds = array<i64: 1>, scalar_prefetch = 0 : i64, scratch_operands = 0 : i64, tpu.core_type = #tpu.core_type<tc>, window_params = [{transform_indices = @transform_0, window_bounds = array<i64: 32, 128>}, {pipeline_mode = #tpu.pipeline_mode<synchronous>, transform_indices = @transform_1, window_bounds = array<i64: 5, 128, 128>}, {pipeline_mode = #tpu.pipeline_mode<synchronous>, transform_indices = @transform_2, window_bounds = array<i64: 8, 128>}, {transform_indices = @transform_3, window_bounds = array<i64: 32, 128>}]} {
    %c0 = arith.constant 0 : index
    %c0_0 = arith.constant 0 : index
    %0 = vector.load %arg1[%c0, %c0_0] : memref<32x128xf32, #tpu.memory_space<vmem>>, vector<32x128xf32>
    %c0_1 = arith.constant 0 : index
    %c0_2 = arith.constant 0 : index
    %1 = vector.load %arg3[%c0_1, %c0_2] : memref<8x128xf32, #tpu.memory_space<vmem>>, vector<8x128xf32>
    %2 = arith.truncf %0 : vector<32x128xf32> to vector<32x128xbf16>
    %c0_3 = arith.constant 0 : index
    %c0_4 = arith.constant 0 : index
    %c0_5 = arith.constant 0 : index
    %3 = vector.load %arg2[%c0_3, %c0_4, %c0_5] : memref<5x128x128xbf16, #tpu.memory_space<vmem>>, vector<1x128x128xbf16>
    %4 = vector.shape_cast %3 : vector<1x128x128xbf16> to vector<128x128xbf16>
    %cst = arith.constant dense<0.000000e+00> : vector<32x128xf32>
    %5 = tpu.matmul %2, %4, %cst {dimension_numbers = #tpu.dot_dimension_numbers<[1], [0], [0], [1], [0, 0, 1, 1], [], []>} : vector<32x128xbf16>, vector<128x128xbf16>, vector<32x128xf32> -> vector<32x128xf32>
    %6 = vector.extract_strided_slice %1 {offsets = [0, 0], sizes = [1, 128], strides = [1, 1]} : vector<8x128xf32> to vector<1x128xf32>
    %7 = vector.shape_cast %6 : vector<1x128xf32> to vector<128xf32>
    %8 = vector.shape_cast %7 : vector<128xf32> to vector<1x128xf32>
    %9 = vector.broadcast %8 : vector<1x128xf32> to vector<32x128xf32>
    %10 = arith.addf %5, %9 : vector<32x128xf32>
    %11 = math.tanh %10 : vector<32x128xf32>
    %12 = arith.truncf %11 : vector<32x128xf32> to vector<32x128xbf16>
    %c1 = arith.constant 1 : index
    %c0_6 = arith.constant 0 : index
    %c0_7 = arith.constant 0 : index
    %13 = vector.load %arg2[%c1, %c0_6, %c0_7] : memref<5x128x128xbf16, #tpu.memory_space<vmem>>, vector<1x128x128xbf16>
    %14 = vector.shape_cast %13 : vector<1x128x128xbf16> to vector<128x128xbf16>
    %cst_8 = arith.constant dense<0.000000e+00> : vector<32x128xf32>
    %15 = tpu.matmul %12, %14, %cst_8 {dimension_numbers = #tpu.dot_dimension_numbers<[1], [0], [0], [1], [0, 0, 1, 1], [], []>} : vector<32x128xbf16>, vector<128x128xbf16>, vector<32x128xf32> -> vector<32x128xf32>
    %16 = vector.extract_strided_slice %1 {offsets = [1, 0], sizes = [1, 128], strides = [1, 1]} : vector<8x128xf32> to vector<1x128xf32>
    %17 = vector.shape_cast %16 : vector<1x128xf32> to vector<128xf32>
    %18 = vector.shape_cast %17 : vector<128xf32> to vector<1x128xf32>
    %19 = vector.broadcast %18 : vector<1x128xf32> to vector<32x128xf32>
    %20 = arith.addf %15, %19 : vector<32x128xf32>
    %21 = math.tanh %20 : vector<32x128xf32>
    %22 = arith.truncf %21 : vector<32x128xf32> to vector<32x128xbf16>
    %c2 = arith.constant 2 : index
    %c0_9 = arith.constant 0 : index
    %c0_10 = arith.constant 0 : index
    %23 = vector.load %arg2[%c2, %c0_9, %c0_10] : memref<5x128x128xbf16, #tpu.memory_space<vmem>>, vector<1x128x128xbf16>
    %24 = vector.shape_cast %23 : vector<1x128x128xbf16> to vector<128x128xbf16>
    %cst_11 = arith.constant dense<0.000000e+00> : vector<32x128xf32>
    %25 = tpu.matmul %22, %24, %cst_11 {dimension_numbers = #tpu.dot_dimension_numbers<[1], [0], [0], [1], [0, 0, 1, 1], [], []>} : vector<32x128xbf16>, vector<128x128xbf16>, vector<32x128xf32> -> vector<32x128xf32>
    %26 = vector.extract_strided_slice %1 {offsets = [2, 0], sizes = [1, 128], strides = [1, 1]} : vector<8x128xf32> to vector<1x128xf32>
    %27 = vector.shape_cast %26 : vector<1x128xf32> to vector<128xf32>
    %28 = vector.shape_cast %27 : vector<128xf32> to vector<1x128xf32>
    %29 = vector.broadcast %28 : vector<1x128xf32> to vector<32x128xf32>
    %30 = arith.addf %25, %29 : vector<32x128xf32>
    %31 = math.tanh %30 : vector<32x128xf32>
    %32 = arith.truncf %31 : vector<32x128xf32> to vector<32x128xbf16>
    %c3 = arith.constant 3 : index
    %c0_12 = arith.constant 0 : index
    %c0_13 = arith.constant 0 : index
    %33 = vector.load %arg2[%c3, %c0_12, %c0_13] : memref<5x128x128xbf16, #tpu.memory_space<vmem>>, vector<1x128x128xbf16>
    %34 = vector.shape_cast %33 : vector<1x128x128xbf16> to vector<128x128xbf16>
    %cst_14 = arith.constant dense<0.000000e+00> : vector<32x128xf32>
    %35 = tpu.matmul %32, %34, %cst_14 {dimension_numbers = #tpu.dot_dimension_numbers<[1], [0], [0], [1], [0, 0, 1, 1], [], []>} : vector<32x128xbf16>, vector<128x128xbf16>, vector<32x128xf32> -> vector<32x128xf32>
    %36 = vector.extract_strided_slice %1 {offsets = [3, 0], sizes = [1, 128], strides = [1, 1]} : vector<8x128xf32> to vector<1x128xf32>
    %37 = vector.shape_cast %36 : vector<1x128xf32> to vector<128xf32>
    %38 = vector.shape_cast %37 : vector<128xf32> to vector<1x128xf32>
    %39 = vector.broadcast %38 : vector<1x128xf32> to vector<32x128xf32>
    %40 = arith.addf %35, %39 : vector<32x128xf32>
    %41 = math.tanh %40 : vector<32x128xf32>
    %42 = arith.truncf %41 : vector<32x128xf32> to vector<32x128xbf16>
    %c4 = arith.constant 4 : index
    %c0_15 = arith.constant 0 : index
    %c0_16 = arith.constant 0 : index
    %43 = vector.load %arg2[%c4, %c0_15, %c0_16] : memref<5x128x128xbf16, #tpu.memory_space<vmem>>, vector<1x128x128xbf16>
    %44 = vector.shape_cast %43 : vector<1x128x128xbf16> to vector<128x128xbf16>
    %cst_17 = arith.constant dense<0.000000e+00> : vector<32x128xf32>
    %45 = tpu.matmul %42, %44, %cst_17 {dimension_numbers = #tpu.dot_dimension_numbers<[1], [0], [0], [1], [0, 0, 1, 1], [], []>} : vector<32x128xbf16>, vector<128x128xbf16>, vector<32x128xf32> -> vector<32x128xf32>
    %46 = vector.extract_strided_slice %1 {offsets = [4, 0], sizes = [1, 128], strides = [1, 1]} : vector<8x128xf32> to vector<1x128xf32>
    %47 = vector.shape_cast %46 : vector<1x128xf32> to vector<128xf32>
    %48 = vector.shape_cast %47 : vector<128xf32> to vector<1x128xf32>
    %49 = vector.broadcast %48 : vector<1x128xf32> to vector<32x128xf32>
    %50 = arith.addf %45, %49 : vector<32x128xf32>
    %c0_18 = arith.constant 0 : index
    %c0_19 = arith.constant 0 : index
    %51 = vector.load %arg4[%c0_18, %c0_19] : memref<32x128xf32, #tpu.memory_space<vmem>>, vector<32x128xf32>
    tpu.vector_store %arg4[%c0_18, %c0_19], %50 {strides = array<i32>} : memref<32x128xf32, #tpu.memory_space<vmem>>, vector<32x128xf32>,
    return
  }
  func.func @transform_0(%arg0: i32) -> (i32, i32) {
    %c0_i32 = arith.constant 0 : i32
    %c0_i32_0 = arith.constant 0 : i32
    return %arg0, %c0_i32 : i32, i32
  }
  func.func @transform_1(%arg0: i32) -> (i32, i32, i32) {
    %c0_i32 = arith.constant 0 : i32
    %c0_i32_0 = arith.constant 0 : i32
    %c0_i32_1 = arith.constant 0 : i32
    %c0_i32_2 = arith.constant 0 : i32
    return %c0_i32, %c0_i32_0, %c0_i32_1 : i32, i32, i32
  }
  func.func @transform_2(%arg0: i32) -> (i32, i32) {
    %c0_i32 = arith.constant 0 : i32
    %c0_i32_0 = arith.constant 0 : i32
    %c0_i32_1 = arith.constant 0 : i32
    return %c0_i32, %c0_i32_0 : i32, i32
  }
  func.func @transform_3(%arg0: i32) -> (i32, i32) {
    %c0_i32 = arith.constant 0 : i32
    %c0_i32_0 = arith.constant 0 : i32
    return %arg0, %c0_i32 : i32, i32
  }
}

</mosaic_0001>

<llo_original>
// kernel: tpu_custom_call.1
$region0: #{tpu_custom_call.1}
  #allocation0 [shape = 'u32[]', space=smem, size = 0x4, offset = 0x4, fixed_abs, tag = 'smem constant byte address 0x4 - core index']
  #allocation1 [shape = 'u32[144,128]{1,0:T(1,128)}', space=vmem, size = 0x12000, scoped, tag = 'internal scratch']
  %s0 = inlined_call_operand.hbm [shape: f32[32,128], index: 0, kind: input, shape index: {}]
  %s1 = inlined_call_operand.hbm [shape: bf16[5,128,128], index: 1, kind: input, shape index: {}]
  %s2 = inlined_call_operand.hbm [shape: f32[8,128], index: 2, kind: input, shape index: {}]
  %s3 = inlined_call_operand.hbm [shape: f32[32,128], index: 3, kind: output, shape index: {}]
  %s4 = sld [smem:[#allocation0]]
  $region34: #{tpu_custom_call.1} parent=0
    _
  %s6 = ssub.s32 1, %s4
  %s7 = scalar_select 0, %s6, %s4
  $region1: #{tpu_custom_call.1} parent=0
    #allocation2 [shape = 'u8[16384]{0}', space=vmem, size = 0x4000, scoped, tag = 'input window, operand 0, single buffered']
    #allocation3 [shape = 's32[1]{0}', space=sflag, size = 0x4, scoped, tag = 'scoped memory for tpu_custom_call.1']
    #allocation4 [shape = 's32[1]{0}', space=sflag, size = 0x4, scoped, tag = 'scoped memory for tpu_custom_call.1']
    #allocation5 [shape = 'u8[163840]{0}', space=vmem, size = 0x28000, scoped, tag = 'input window, operand 1, single buffered']
    #allocation6 [shape = 's32[1]{0}', space=sflag, size = 0x4, scoped, tag = 'scoped memory for tpu_custom_call.1']
    #allocation7 [shape = 'u8[4096]{0}', space=vmem, size = 0x1000, scoped, tag = 'input window, operand 2, single buffered']
    #allocation8 [shape = 'u8[16384]{0}', space=vmem, size = 0x4000, scoped, tag = 'output window, operand 0, single buffered']
    %8 = vsyncpa [#allocation3], 0
    %9 = vsyncpa [#allocation6], 0
    %10 = vsyncpa [#allocation4], 0
    // Predicated region
    $region2: #{tpu_custom_call.1} parent=1 // pred_check
      _
    $region3: #{tpu_custom_call.1} parent=1 // pred_check_branch
      %12 = sbr.rel (0) target = $region5
    $region4: #{tpu_custom_call.1} parent=1 // pred_region
      %s14 = ssub.s32 512, 512
      %15 = vsyncadd [#allocation3], %s14
      %s16 = sshll.u32 [#allocation2], 4
      %s17 = int_to_ptr.vmem [resolvable:$true] %s16
      %22 = dma.hbm_to_vmem [thread:$0]  %s0, 512, %s17, [#allocation3], 128, 128, 8
    $region5: #{tpu_custom_call.1} parent=1 // pred_fallthru
      _
    // Predicated region
    $region6: #{tpu_custom_call.1} parent=1 // pred_check
      _
    $region7: #{tpu_custom_call.1} parent=1 // pred_check_branch
      %24 = sbr.rel (0) target = $region9
    $region8: #{tpu_custom_call.1} parent=1 // pred_region
      %s26 = ssub.s32 5120, 5120
      %27 = vsyncadd [#allocation6], %s26
      %s28 = sshll.u32 [#allocation5], 4
      %s29 = int_to_ptr.vmem [resolvable:$true] %s28
      %34 = dma.hbm_to_vmem [thread:$0]  %s1, 5120, %s29, [#allocation6], 64, 64, 4
    $region9: #{tpu_custom_call.1} parent=1 // pred_fallthru
      _
    // Predicated region
    $region10: #{tpu_custom_call.1} parent=1 // pred_check
      _
    $region11: #{tpu_custom_call.1} parent=1 // pred_check_branch
      %36 = sbr.rel (0) target = $region13
    $region12: #{tpu_custom_call.1} parent=1 // pred_region
      %s38 = ssub.s32 128, 128
      %39 = vsyncadd [#allocation6], %s38
      %s41 = sshll.u32 [#allocation7], 4
      %s42 = int_to_ptr.vmem [resolvable:$true] %s41
      %44 = dma.hbm_to_vmem [thread:$0]  %s2, 128, %s42, [#allocation6]
    $region13: #{tpu_custom_call.1} parent=1 // pred_fallthru
      _
    // Predicated region
    $region14: #{tpu_custom_call.1} parent=1 // pred_check
      _
    $region15: #{tpu_custom_call.1} parent=1 // pred_check_branch
      %46 = sbr.rel (0) target = $region17
    $region16: #{tpu_custom_call.1} parent=1 // pred_region
      %47 = dma.done [#allocation3], 512
    $region17: #{tpu_custom_call.1} parent=1 // pred_fallthru
      _
    // Predicated region
    $region18: #{tpu_custom_call.1} parent=1 // pred_check
      _
    $region19: #{tpu_custom_call.1} parent=1 // pred_check_branch
      %49 = sbr.rel (0) target = $region21
    $region20: #{tpu_custom_call.1} parent=1 // pred_region
      %50 = dma.done [#allocation6], 5120
    $region21: #{tpu_custom_call.1} parent=1 // pred_fallthru
      _
    // Predicated region
    $region22: #{tpu_custom_call.1} parent=1 // pred_check
      _
    $region23: #{tpu_custom_call.1} parent=1 // pred_check_branch
      %52 = sbr.rel (0) target = $region25
    $region24: #{tpu_custom_call.1} parent=1 // pred_region
      %53 = dma.done [#allocation6], 128
    $region25: #{tpu_custom_call.1} parent=1 // pred_fallthru
      _
    %v55 = vld [vmem:[#allocation2] sm:$0xff]
    %v56 = vld [vmem:[#allocation2 + $0x8] sm:$0xff]
    %v57 = vld [vmem:[#allocation2 + $0x10] sm:$0xff]
    %v58 = vld [vmem:[#allocation2 + $0x18] sm:$0xff]
    %v59 = vld [vmem:[#allocation7] sm:$0xff]
    %v60 = vpack.c.bf16 %v56, %v55
    %v61 = vpack.c.bf16 %v58, %v57
    %v62 = vld [vmem:[#allocation5] sm:$0xf]
    %v63 = vld [vmem:[#allocation5 + $0x4] sm:$0xf]
    %v64 = vld [vmem:[#allocation5 + $0x8] sm:$0xf]
    %v65 = vld [vmem:[#allocation5 + $0xc] sm:$0xf]
    %v66 = vld [vmem:[#allocation5 + $0x10] sm:$0xf]
    %v67 = vld [vmem:[#allocation5 + $0x14] sm:$0xf]
    %v68 = vld [vmem:[#allocation5 + $0x18] sm:$0xf]
    %v69 = vld [vmem:[#allocation5 + $0x1c] sm:$0xf]
    %v70 = vld [vmem:[#allocation5 + $0x20] sm:$0xf]
    %v71 = vld [vmem:[#allocation5 + $0x24] sm:$0xf]
    %v72 = vld [vmem:[#allocation5 + $0x28] sm:$0xf]
    %v73 = vld [vmem:[#allocation5 + $0x2c] sm:$0xf]
    %v74 = vld [vmem:[#allocation5 + $0x30] sm:$0xf]
    %v75 = vld [vmem:[#allocation5 + $0x34] sm:$0xf]
    %v76 = vld [vmem:[#allocation5 + $0x38] sm:$0xf]
    %v77 = vld [vmem:[#allocation5 + $0x3c] sm:$0xf]
    %v78 = vlaneseq
    %v79 = vshrl.u32 %v78, 7
    %v80 = vsub.s32 0, %v79
    %v81 = vrot.slane %v59, %v80
    %v98 = vunpack.c.l.b16 %v62
    %v99 = vunpack.c.l.b16 %v63
    %v100 = vunpack.c.l.b16 %v64
    %v101 = vunpack.c.l.b16 %v65
    %v102 = vunpack.c.l.b16 %v66
    %v103 = vunpack.c.l.b16 %v67
    %v104 = vunpack.c.l.b16 %v68
    %v105 = vunpack.c.l.b16 %v69
    %v106 = vunpack.c.l.b16 %v70
    %v107 = vunpack.c.l.b16 %v71
    %v108 = vunpack.c.l.b16 %v72
    %v109 = vunpack.c.l.b16 %v73
    %v110 = vunpack.c.l.b16 %v74
    %v111 = vunpack.c.l.b16 %v75
    %v112 = vunpack.c.l.b16 %v76
    %v113 = vunpack.c.l.b16 %v77
    %v114 = vpack.c.b16 %v99, %v98
    %v115 = vpack.c.b16 %v101, %v100
    %v116 = vpack.c.b16 %v103, %v102
    %v117 = vpack.c.b16 %v105, %v104
    %v118 = vpack.c.b16 %v107, %v106
    %v119 = vpack.c.b16 %v109, %v108
    %v120 = vpack.c.b16 %v111, %v110
    %v121 = vpack.c.b16 %v113, %v112
    %130 = vmatprep.subr.bf16.mxu0 0
    %131 = vmatpush1.bf16.msra.mxu0 %v114
    %132 = vmatprep.subr.bf16.mxu0 0
    %133 = vmatpush1.bf16.msra.mxu0 %v115
    %134 = vmatprep.subr.bf16.mxu0 0
    %135 = vmatpush1.bf16.msra.mxu0 %v116
    %136 = vmatprep.subr.bf16.mxu0 0
    %137 = vmatpush1.bf16.msra.mxu0 %v117
    %138 = vmatprep.subr.bf16.mxu0 0
    %139 = vmatpush1.bf16.msra.mxu0 %v118
    %140 = vmatprep.subr.bf16.mxu0 0
    %141 = vmatpush1.bf16.msra.mxu0 %v119
    %142 = vmatprep.subr.bf16.mxu0 0
    %143 = vmatpush1.bf16.msra.mxu0 %v120
    %144 = vmatprep.subr.bf16.mxu0 0
    %145 = vmatpush1.bf16.msra.mxu0 %v121
    %146 = vmatprep.subr.bf16.mxu0 0
    %147 = vmatpush1.bf16.msra.mxu0 0
    %148 = vmatprep.subr.bf16.mxu0 0
    %149 = vmatpush1.bf16.msra.mxu0 0
    %150 = vmatprep.subr.bf16.mxu0 0
    %151 = vmatpush1.bf16.msra.mxu0 0
    %152 = vmatprep.subr.bf16.mxu0 0
    %153 = vmatpush1.bf16.msra.mxu0 0
    %154 = vmatprep.subr.bf16.mxu0 0
    %155 = vmatpush1.bf16.msra.mxu0 0
    %156 = vmatprep.subr.bf16.mxu0 0
    %157 = vmatpush1.bf16.msra.mxu0 0
    %158 = vmatprep.subr.bf16.mxu0 0
    %159 = vmatpush1.bf16.msra.mxu0 0
    %160 = vmatprep.subr.bf16.mxu0 0
    %161 = vmatpush1.bf16.msra.mxu0 0
    %162 = vmatprep.mubr.bf16.mxu0 0
    %163 = vmatmul.mubr.bf16.gmra.mrb[0].mxu0 %v60
    %v164 = vpop.f32.mrb[0].mxu0
    %v165 = vadd.f32 %v81, %v164
    %v166 = vpop.f32.mrb[0].mxu0
    %v167 = vpop.f32.mrb[0].mxu0
    %v168 = vadd.f32 %v81, %v167
    %v169 = vpop.f32.mrb[0].mxu0
    %170 = vmatprep.mubr.bf16.mxu0 0
    %171 = vmatmul.mubr.bf16.gmra.mrb[0].mxu0 %v61
    %v172 = vpop.f32.mrb[0].mxu0
    %v173 = vadd.f32 %v81, %v172
    %v174 = vpop.f32.mrb[0].mxu0
    %v175 = vpop.f32.mrb[0].mxu0
    %v176 = vadd.f32 %v81, %v175
    %v177 = vpop.f32.mrb[0].mxu0
    %178 = vdwg.mxu0
    %v179 = vtanh.pop %v165
    %v180 = vtanh.pop %v168
    %v181 = vtanh.pop %v173
    %v182 = vtanh.pop %v176
    %v183 = vpack.c.bf16 %v180, %v179
    %v184 = vpack.c.bf16 %v182, %v181
    %s185 = scalar_lea.vmem [#allocation5], 64
    %v186 = vld [vmem:[%s185] sm:$0xf]
    %v187 = vld [vmem:[%s185 + $0x4] sm:$0xf]
    %v188 = vld [vmem:[%s185 + $0x8] sm:$0xf]
    %v189 = vld [vmem:[%s185 + $0xc] sm:$0xf]
    %v190 = vld [vmem:[%s185 + $0x10] sm:$0xf]
    %v191 = vld [vmem:[%s185 + $0x14] sm:$0xf]
    %v192 = vld [vmem:[%s185 + $0x18] sm:$0xf]
    %v193 = vld [vmem:[%s185 + $0x1c] sm:$0xf]
    %v194 = vld [vmem:[%s185 + $0x20] sm:$0xf]
    %v195 = vld [vmem:[%s185 + $0x24] sm:$0xf]
    %v196 = vld [vmem:[%s185 + $0x28] sm:$0xf]
    %v197 = vld [vmem:[%s185 + $0x2c] sm:$0xf]
    %v198 = vld [vmem:[%s185 + $0x30] sm:$0xf]
    %v199 = vld [vmem:[%s185 + $0x34] sm:$0xf]
    %v200 = vld [vmem:[%s185 + $0x38] sm:$0xf]
    %v201 = vld [vmem:[%s185 + $0x3c] sm:$0xf]
    %v202 = vlaneseq
    %v203 = vshrl.u32 %v202, 7
    %v204 = vsub.s32 1, %v203
    %v205 = vrot.slane %v59, %v204
    %v222 = vunpack.c.l.b16 %v186
    %v223 = vunpack.c.l.b16 %v187
    %v224 = vunpack.c.l.b16 %v188
    %v225 = vunpack.c.l.b16 %v189
    %v226 = vunpack.c.l.b16 %v190
    %v227 = vunpack.c.l.b16 %v191
    %v228 = vunpack.c.l.b16 %v192
    %v229 = vunpack.c.l.b16 %v193
    %v230 = vunpack.c.l.b16 %v194
    %v231 = vunpack.c.l.b16 %v195
    %v232 = vunpack.c.l.b16 %v196
    %v233 = vunpack.c.l.b16 %v197
    %v234 = vunpack.c.l.b16 %v198
    %v235 = vunpack.c.l.b16 %v199
    %v236 = vunpack.c.l.b16 %v200
    %v237 = vunpack.c.l.b16 %v201
    %v238 = vpack.c.b16 %v223, %v222
    %v239 = vpack.c.b16 %v225, %v224
    %v240 = vpack.c.b16 %v227, %v226
    %v241 = vpack.c.b16 %v229, %v228
    %v242 = vpack.c.b16 %v231, %v230
    %v243 = vpack.c.b16 %v233, %v232
    %v244 = vpack.c.b16 %v235, %v234
    %v245 = vpack.c.b16 %v237, %v236
    %254 = vmatprep.subr.bf16.mxu0 0
    %255 = vmatpush1.bf16.msra.mxu0 %v238
    %256 = vmatprep.subr.bf16.mxu0 0
    %257 = vmatpush1.bf16.msra.mxu0 %v239
    %258 = vmatprep.subr.bf16.mxu0 0
    %259 = vmatpush1.bf16.msra.mxu0 %v240
    %260 = vmatprep.subr.bf16.mxu0 0
    %261 = vmatpush1.bf16.msra.mxu0 %v241
    %262 = vmatprep.subr.bf16.mxu0 0
    %263 = vmatpush1.bf16.msra.mxu0 %v242
    %264 = vmatprep.subr.bf16.mxu0 0
    %265 = vmatpush1.bf16.msra.mxu0 %v243
    %266 = vmatprep.subr.bf16.mxu0 0
    %267 = vmatpush1.bf16.msra.mxu0 %v244
    %268 = vmatprep.subr.bf16.mxu0 0
    %269 = vmatpush1.bf16.msra.mxu0 %v245
    %270 = vmatprep.subr.bf16.mxu0 0
    %271 = vmatpush1.bf16.msra.mxu0 0
    %272 = vmatprep.subr.bf16.mxu0 0
    %273 = vmatpush1.bf16.msra.mxu0 0
    %274 = vmatprep.subr.bf16.mxu0 0
    %275 = vmatpush1.bf16.msra.mxu0 0
    %276 = vmatprep.subr.bf16.mxu0 0
    %277 = vmatpush1.bf16.msra.mxu0 0
    %278 = vmatprep.subr.bf16.mxu0 0
    %279 = vmatpush1.bf16.msra.mxu0 0
    %280 = vmatprep.subr.bf16.mxu0 0
    %281 = vmatpush1.bf16.msra.mxu0 0
    %282 = vmatprep.subr.bf16.mxu0 0
    %283 = vmatpush1.bf16.msra.mxu0 0
    %284 = vmatprep.subr.bf16.mxu0 0
    %285 = vmatpush1.bf16.msra.mxu0 0
    %286 = vmatprep.mubr.bf16.mxu0 0
    %287 = vmatmul.mubr.bf16.gmra.mrb[0].mxu0 %v183
    %v288 = vpop.f32.mrb[0].mxu0
    %v289 = vadd.f32 %v205, %v288
    %v290 = vpop.f32.mrb[0].mxu0
    %v291 = vpop.f32.mrb[0].mxu0
    %v292 = vadd.f32 %v205, %v291
    %v293 = vpop.f32.mrb[0].mxu0
    %294 = vmatprep.mubr.bf16.mxu0 0
    %295 = vmatmul.mubr.bf16.gmra.mrb[0].mxu0 %v184
    %v296 = vpop.f32.mrb[0].mxu0
    %v297 = vadd.f32 %v205, %v296
    %v298 = vpop.f32.mrb[0].mxu0
    %v299 = vpop.f32.mrb[0].mxu0
    %v300 = vadd.f32 %v205, %v299
    %v301 = vpop.f32.mrb[0].mxu0
    %302 = vdwg.mxu0
    %v303 = vtanh.pop %v289
    %v304 = vtanh.pop %v292
    %v305 = vtanh.pop %v297
    %v306 = vtanh.pop %v300
    %v307 = vpack.c.bf16 %v304, %v303
    %v308 = vpack.c.bf16 %v306, %v305
    %s309 = scalar_lea.vmem [#allocation5], 128
    %v310 = vld [vmem:[%s309] sm:$0xf]
    %v311 = vld [vmem:[%s309 + $0x4] sm:$0xf]
    %v312 = vld [vmem:[%s309 + $0x8] sm:$0xf]
    %v313 = vld [vmem:[%s309 + $0xc] sm:$0xf]
    %v314 = vld [vmem:[%s309 + $0x10] sm:$0xf]
    %v315 = vld [vmem:[%s309 + $0x14] sm:$0xf]
    %v316 = vld [vmem:[%s309 + $0x18] sm:$0xf]
    %v317 = vld [vmem:[%s309 + $0x1c] sm:$0xf]
    %v318 = vld [vmem:[%s309 + $0x20] sm:$0xf]
    %v319 = vld [vmem:[%s309 + $0x24] sm:$0xf]
    %v320 = vld [vmem:[%s309 + $0x28] sm:$0xf]
    %v321 = vld [vmem:[%s309 + $0x2c] sm:$0xf]
    %v322 = vld [vmem:[%s309 + $0x30] sm:$0xf]
    %v323 = vld [vmem:[%s309 + $0x34] sm:$0xf]
    %v324 = vld [vmem:[%s309 + $0x38] sm:$0xf]
    %v325 = vld [vmem:[%s309 + $0x3c] sm:$0xf]
    %v326 = vlaneseq
    %v327 = vshrl.u32 %v326, 7
    %v328 = vsub.s32 2, %v327
    %v329 = vrot.slane %v59, %v328
    %v346 = vunpack.c.l.b16 %v310
    %v347 = vunpack.c.l.b16 %v311
    %v348 = vunpack.c.l.b16 %v312
    %v349 = vunpack.c.l.b16 %v313
    %v350 = vunpack.c.l.b16 %v314
    %v351 = vunpack.c.l.b16 %v315
    %v352 = vunpack.c.l.b16 %v316
    %v353 = vunpack.c.l.b16 %v317
    %v354 = vunpack.c.l.b16 %v318
    %v355 = vunpack.c.l.b16 %v319
    %v356 = vunpack.c.l.b16 %v320
    %v357 = vunpack.c.l.b16 %v321
    %v358 = vunpack.c.l.b16 %v322
    %v359 = vunpack.c.l.b16 %v323
    %v360 = vunpack.c.l.b16 %v324
    %v361 = vunpack.c.l.b16 %v325
    %v362 = vpack.c.b16 %v347, %v346
    %v363 = vpack.c.b16 %v349, %v348
    %v364 = vpack.c.b16 %v351, %v350
    %v365 = vpack.c.b16 %v353, %v352
    %v366 = vpack.c.b16 %v355, %v354
    %v367 = vpack.c.b16 %v357, %v356
    %v368 = vpack.c.b16 %v359, %v358
    %v369 = vpack.c.b16 %v361, %v360
    %378 = vmatprep.subr.bf16.mxu0 0
    %379 = vmatpush1.bf16.msra.mxu0 %v362
    %380 = vmatprep.subr.bf16.mxu0 0
    %381 = vmatpush1.bf16.msra.mxu0 %v363
    %382 = vmatprep.subr.bf16.mxu0 0
    %383 = vmatpush1.bf16.msra.mxu0 %v364
    %384 = vmatprep.subr.bf16.mxu0 0
    %385 = vmatpush1.bf16.msra.mxu0 %v365
    %386 = vmatprep.subr.bf16.mxu0 0
    %387 = vmatpush1.bf16.msra.mxu0 %v366
    %388 = vmatprep.subr.bf16.mxu0 0
    %389 = vmatpush1.bf16.msra.mxu0 %v367
    %390 = vmatprep.subr.bf16.mxu0 0
    %391 = vmatpush1.bf16.msra.mxu0 %v368
    %392 = vmatprep.subr.bf16.mxu0 0
    %393 = vmatpush1.bf16.msra.mxu0 %v369
    %394 = vmatprep.subr.bf16.mxu0 0
    %395 = vmatpush1.bf16.msra.mxu0 0
    %396 = vmatprep.subr.bf16.mxu0 0
    %397 = vmatpush1.bf16.msra.mxu0 0
    %398 = vmatprep.subr.bf16.mxu0 0
    %399 = vmatpush1.bf16.msra.mxu0 0
    %400 = vmatprep.subr.bf16.mxu0 0
    %401 = vmatpush1.bf16.msra.mxu0 0
    %402 = vmatprep.subr.bf16.mxu0 0
    %403 = vmatpush1.bf16.msra.mxu0 0
    %404 = vmatprep.subr.bf16.mxu0 0
    %405 = vmatpush1.bf16.msra.mxu0 0
    %406 = vmatprep.subr.bf16.mxu0 0
    %407 = vmatpush1.bf16.msra.mxu0 0
    %408 = vmatprep.subr.bf16.mxu0 0
    %409 = vmatpush1.bf16.msra.mxu0 0
    %410 = vmatprep.mubr.bf16.mxu0 0
    %411 = vmatmul.mubr.bf16.gmra.mrb[0].mxu0 %v307
    %v412 = vpop.f32.mrb[0].mxu0
    %v413 = vadd.f32 %v329, %v412
    %v414 = vpop.f32.mrb[0].mxu0
    %v415 = vpop.f32.mrb[0].mxu0
    %v416 = vadd.f32 %v329, %v415
    %v417 = vpop.f32.mrb[0].mxu0
    %418 = vmatprep.mubr.bf16.mxu0 0
    %419 = vmatmul.mubr.bf16.gmra.mrb[0].mxu0 %v308
    %v420 = vpop.f32.mrb[0].mxu0
    %v421 = vadd.f32 %v329, %v420
    %v422 = vpop.f32.mrb[0].mxu0
    %v423 = vpop.f32.mrb[0].mxu0
    %v424 = vadd.f32 %v329, %v423
    %v425 = vpop.f32.mrb[0].mxu0
    %426 = vdwg.mxu0
    %v427 = vtanh.pop %v413
    %v428 = vtanh.pop %v416
    %v429 = vtanh.pop %v421
    %v430 = vtanh.pop %v424
    %v431 = vpack.c.bf16 %v428, %v427
    %v432 = vpack.c.bf16 %v430, %v429
    %s433 = scalar_lea.vmem [#allocation5], 192
    %v434 = vld [vmem:[%s433] sm:$0xf]
    %v435 = vld [vmem:[%s433 + $0x4] sm:$0xf]
    %v436 = vld [vmem:[%s433 + $0x8] sm:$0xf]
    %v437 = vld [vmem:[%s433 + $0xc] sm:$0xf]
    %v438 = vld [vmem:[%s433 + $0x10] sm:$0xf]
    %v439 = vld [vmem:[%s433 + $0x14] sm:$0xf]
    %v440 = vld [vmem:[%s433 + $0x18] sm:$0xf]
    %v441 = vld [vmem:[%s433 + $0x1c] sm:$0xf]
    %v442 = vld [vmem:[%s433 + $0x20] sm:$0xf]
    %v443 = vld [vmem:[%s433 + $0x24] sm:$0xf]
    %v444 = vld [vmem:[%s433 + $0x28] sm:$0xf]
    %v445 = vld [vmem:[%s433 + $0x2c] sm:$0xf]
    %v446 = vld [vmem:[%s433 + $0x30] sm:$0xf]
    %v447 = vld [vmem:[%s433 + $0x34] sm:$0xf]
    %v448 = vld [vmem:[%s433 + $0x38] sm:$0xf]
    %v449 = vld [vmem:[%s433 + $0x3c] sm:$0xf]
    %v450 = vlaneseq
    %v451 = vshrl.u32 %v450, 7
    %v452 = vsub.s32 3, %v451
    %v453 = vrot.slane %v59, %v452
    %v470 = vunpack.c.l.b16 %v434
    %v471 = vunpack.c.l.b16 %v435
    %v472 = vunpack.c.l.b16 %v436
    %v473 = vunpack.c.l.b16 %v437
    %v474 = vunpack.c.l.b16 %v438
    %v475 = vunpack.c.l.b16 %v439
    %v476 = vunpack.c.l.b16 %v440
    %v477 = vunpack.c.l.b16 %v441
    %v478 = vunpack.c.l.b16 %v442
    %v479 = vunpack.c.l.b16 %v443
    %v480 = vunpack.c.l.b16 %v444
    %v481 = vunpack.c.l.b16 %v445
    %v482 = vunpack.c.l.b16 %v446
    %v483 = vunpack.c.l.b16 %v447
    %v484 = vunpack.c.l.b16 %v448
    %v485 = vunpack.c.l.b16 %v449
    %v486 = vpack.c.b16 %v471, %v470
    %v487 = vpack.c.b16 %v473, %v472
    %v488 = vpack.c.b16 %v475, %v474
    %v489 = vpack.c.b16 %v477, %v476
    %v490 = vpack.c.b16 %v479, %v478
    %v491 = vpack.c.b16 %v481, %v480
    %v492 = vpack.c.b16 %v483, %v482
    %v493 = vpack.c.b16 %v485, %v484
    %502 = vmatprep.subr.bf16.mxu0 0
    %503 = vmatpush1.bf16.msra.mxu0 %v486
    %504 = vmatprep.subr.bf16.mxu0 0
    %505 = vmatpush1.bf16.msra.mxu0 %v487
    %506 = vmatprep.subr.bf16.mxu0 0
    %507 = vmatpush1.bf16.msra.mxu0 %v488
    %508 = vmatprep.subr.bf16.mxu0 0
    %509 = vmatpush1.bf16.msra.mxu0 %v489
    %510 = vmatprep.subr.bf16.mxu0 0
    %511 = vmatpush1.bf16.msra.mxu0 %v490
    %512 = vmatprep.subr.bf16.mxu0 0
    %513 = vmatpush1.bf16.msra.mxu0 %v491
    %514 = vmatprep.subr.bf16.mxu0 0
    %515 = vmatpush1.bf16.msra.mxu0 %v492
    %516 = vmatprep.subr.bf16.mxu0 0
    %517 = vmatpush1.bf16.msra.mxu0 %v493
    %518 = vmatprep.subr.bf16.mxu0 0
    %519 = vmatpush1.bf16.msra.mxu0 0
    %520 = vmatprep.subr.bf16.mxu0 0
    %521 = vmatpush1.bf16.msra.mxu0 0
    %522 = vmatprep.subr.bf16.mxu0 0
    %523 = vmatpush1.bf16.msra.mxu0 0
    %524 = vmatprep.subr.bf16.mxu0 0
    %525 = vmatpush1.bf16.msra.mxu0 0
    %526 = vmatprep.subr.bf16.mxu0 0
    %527 = vmatpush1.bf16.msra.mxu0 0
    %528 = vmatprep.subr.bf16.mxu0 0
    %529 = vmatpush1.bf16.msra.mxu0 0
    %530 = vmatprep.subr.bf16.mxu0 0
    %531 = vmatpush1.bf16.msra.mxu0 0
    %532 = vmatprep.subr.bf16.mxu0 0
    %533 = vmatpush1.bf16.msra.mxu0 0
    %534 = vmatprep.mubr.bf16.mxu0 0
    %535 = vmatmul.mubr.bf16.gmra.mrb[0].mxu0 %v431
    %v536 = vpop.f32.mrb[0].mxu0
    %v537 = vadd.f32 %v453, %v536
    %v538 = vpop.f32.mrb[0].mxu0
    %v539 = vpop.f32.mrb[0].mxu0
    %v540 = vadd.f32 %v453, %v539
    %v541 = vpop.f32.mrb[0].mxu0
    %542 = vmatprep.mubr.bf16.mxu0 0
    %543 = vmatmul.mubr.bf16.gmra.mrb[0].mxu0 %v432
    %v544 = vpop.f32.mrb[0].mxu0
    %v545 = vadd.f32 %v453, %v544
    %v546 = vpop.f32.mrb[0].mxu0
    %v547 = vpop.f32.mrb[0].mxu0
    %v548 = vadd.f32 %v453, %v547
    %v549 = vpop.f32.mrb[0].mxu0
    %550 = vdwg.mxu0
    %v551 = vtanh.pop %v537
    %v552 = vtanh.pop %v540
    %v553 = vtanh.pop %v545
    %v554 = vtanh.pop %v548
    %v555 = vpack.c.bf16 %v552, %v551
    %v556 = vpack.c.bf16 %v554, %v553
    %s557 = scalar_lea.vmem [#allocation5], 256
    %v558 = vld [vmem:[%s557] sm:$0xf]
    %v559 = vld [vmem:[%s557 + $0x4] sm:$0xf]
    %v560 = vld [vmem:[%s557 + $0x8] sm:$0xf]
    %v561 = vld [vmem:[%s557 + $0xc] sm:$0xf]
    %v562 = vld [vmem:[%s557 + $0x10] sm:$0xf]
    %v563 = vld [vmem:[%s557 + $0x14] sm:$0xf]
    %v564 = vld [vmem:[%s557 + $0x18] sm:$0xf]
    %v565 = vld [vmem:[%s557 + $0x1c] sm:$0xf]
    %v566 = vld [vmem:[%s557 + $0x20] sm:$0xf]
    %v567 = vld [vmem:[%s557 + $0x24] sm:$0xf]
    %v568 = vld [vmem:[%s557 + $0x28] sm:$0xf]
    %v569 = vld [vmem:[%s557 + $0x2c] sm:$0xf]
    %v570 = vld [vmem:[%s557 + $0x30] sm:$0xf]
    %v571 = vld [vmem:[%s557 + $0x34] sm:$0xf]
    %v572 = vld [vmem:[%s557 + $0x38] sm:$0xf]
    %v573 = vld [vmem:[%s557 + $0x3c] sm:$0xf]
    %v574 = vlaneseq
    %v575 = vshrl.u32 %v574, 7
    %v576 = vsub.s32 4, %v575
    %v577 = vrot.slane %v59, %v576
    %v594 = vunpack.c.l.b16 %v558
    %v595 = vunpack.c.l.b16 %v559
    %v596 = vunpack.c.l.b16 %v560
    %v597 = vunpack.c.l.b16 %v561
    %v598 = vunpack.c.l.b16 %v562
    %v599 = vunpack.c.l.b16 %v563
    %v600 = vunpack.c.l.b16 %v564
    %v601 = vunpack.c.l.b16 %v565
    %v602 = vunpack.c.l.b16 %v566
    %v603 = vunpack.c.l.b16 %v567
    %v604 = vunpack.c.l.b16 %v568
    %v605 = vunpack.c.l.b16 %v569
    %v606 = vunpack.c.l.b16 %v570
    %v607 = vunpack.c.l.b16 %v571
    %v608 = vunpack.c.l.b16 %v572
    %v609 = vunpack.c.l.b16 %v573
    %v610 = vpack.c.b16 %v595, %v594
    %v611 = vpack.c.b16 %v597, %v596
    %v612 = vpack.c.b16 %v599, %v598
    %v613 = vpack.c.b16 %v601, %v600
    %v614 = vpack.c.b16 %v603, %v602
    %v615 = vpack.c.b16 %v605, %v604
    %v616 = vpack.c.b16 %v607, %v606
    %v617 = vpack.c.b16 %v609, %v608
    %626 = vmatprep.subr.bf16.mxu0 0
    %627 = vmatpush1.bf16.msra.mxu0 %v610
    %628 = vmatprep.subr.bf16.mxu0 0
    %629 = vmatpush1.bf16.msra.mxu0 %v611
    %630 = vmatprep.subr.bf16.mxu0 0
    %631 = vmatpush1.bf16.msra.mxu0 %v612
    %632 = vmatprep.subr.bf16.mxu0 0
    %633 = vmatpush1.bf16.msra.mxu0 %v613
    %634 = vmatprep.subr.bf16.mxu0 0
    %635 = vmatpush1.bf16.msra.mxu0 %v614
    %636 = vmatprep.subr.bf16.mxu0 0
    %637 = vmatpush1.bf16.msra.mxu0 %v615
    %638 = vmatprep.subr.bf16.mxu0 0
    %639 = vmatpush1.bf16.msra.mxu0 %v616
    %640 = vmatprep.subr.bf16.mxu0 0
    %641 = vmatpush1.bf16.msra.mxu0 %v617
    %642 = vmatprep.subr.bf16.mxu0 0
    %643 = vmatpush1.bf16.msra.mxu0 0
    %644 = vmatprep.subr.bf16.mxu0 0
    %645 = vmatpush1.bf16.msra.mxu0 0
    %646 = vmatprep.subr.bf16.mxu0 0
    %647 = vmatpush1.bf16.msra.mxu0 0
    %648 = vmatprep.subr.bf16.mxu0 0
    %649 = vmatpush1.bf16.msra.mxu0 0
    %650 = vmatprep.subr.bf16.mxu0 0
    %651 = vmatpush1.bf16.msra.mxu0 0
    %652 = vmatprep.subr.bf16.mxu0 0
    %653 = vmatpush1.bf16.msra.mxu0 0
    %654 = vmatprep.subr.bf16.mxu0 0
    %655 = vmatpush1.bf16.msra.mxu0 0
    %656 = vmatprep.subr.bf16.mxu0 0
    %657 = vmatpush1.bf16.msra.mxu0 0
    %658 = vmatprep.mubr.bf16.mxu0 0
    %659 = vmatmul.mubr.bf16.gmra.mrb[0].mxu0 %v555
    %v660 = vpop.f32.mrb[0].mxu0
    %v661 = vadd.f32 %v577, %v660
    %v662 = vpop.f32.mrb[0].mxu0
    %v663 = vpop.f32.mrb[0].mxu0
    %v664 = vadd.f32 %v577, %v663
    %v665 = vpop.f32.mrb[0].mxu0
    %666 = vmatprep.mubr.bf16.mxu0 0
    %667 = vmatmul.mubr.bf16.gmra.mrb[0].mxu0 %v556
    %v668 = vpop.f32.mrb[0].mxu0
    %v669 = vadd.f32 %v577, %v668
    %v670 = vpop.f32.mrb[0].mxu0
    %v671 = vpop.f32.mrb[0].mxu0
    %v672 = vadd.f32 %v577, %v671
    %v673 = vpop.f32.mrb[0].mxu0
    %674 = vdwg.mxu0
    %675 = vst [vmem:[#allocation8] sm:$0xff] %v661
    %676 = vst [vmem:[#allocation8 + $0x8] sm:$0xff] %v664
    %677 = vst [vmem:[#allocation8 + $0x10] sm:$0xff] %v669
    %678 = vst [vmem:[#allocation8 + $0x18] sm:$0xff] %v672
    // Predicated region
    $region26: #{tpu_custom_call.1} parent=1 // pred_check
      _
    $region27: #{tpu_custom_call.1} parent=1 // pred_check_branch
      %680 = sbr.rel (0) target = $region29
    $region28: #{tpu_custom_call.1} parent=1 // pred_region
      %s682 = ssub.s32 512, 512
      %683 = vsyncadd [#allocation4], %s682
      %s684 = sshll.u32 [#allocation8], 4
      %s685 = int_to_ptr.vmem [resolvable:$true] %s684
      %690 = dma.vmem_to_hbm [thread:$0]  %s685, 512, %s3, [#allocation4], 128, 128, 8
    $region29: #{tpu_custom_call.1} parent=1 // pred_fallthru
      _
    // Predicated region
    $region30: #{tpu_custom_call.1} parent=1 // pred_check
      _
    $region31: #{tpu_custom_call.1} parent=1 // pred_check_branch
      %692 = sbr.rel (0) target = $region33
    $region32: #{tpu_custom_call.1} parent=1 // pred_region
      %693 = dma.done [#allocation4], 512
    $region33: #{tpu_custom_call.1} parent=1 // pred_fallthru
      _
    %694 = vsyncpa [#allocation3], 1
    %695 = vsyncpa [#allocation6], 1
    %696 = vsyncpa [#allocation4], 1

</llo_original>
